<compile_context>
chip_gen: v7x
topology: tpu7x:2x2x1
jax: 0.10.0
libtpu: 0.0.40
codegen_flags: <defaults>
</compile_context>

<pallas_src>
import jax
import jax.numpy as jnp
from jax.experimental import pallas as pl
from jax.experimental.pallas import tpu as pltpu

H_IN = 1024    # fc1 in_features
H_MID = 32     # fc1 out_features (as declared in the module)
H_FC2_IN = 8   # fc2 in_features (mismatched vs H_MID in the original module)
H_OUT = 1      # fc2 out_features

TB_CAP = 2048  # max batch tile: 2048 * 1024 * 4B (f32) = 8 MiB per buffer


def _round_up(n, m):
    return ((n + m - 1) // m) * m


def _choose_tb(batch, requested=None):
    if requested is not None:
        return max(8, _round_up(min(requested, max(batch, 1)), 8))
    # Target >= 4 tiles so v7x's two TensorCores each get >= 2 tiles; cap at TB_CAP.
    return max(8, min(TB_CAP, _round_up(-(-batch // 4), 8)))


def _head_kernel(x_ref, w1_ref, b1_ref, w2_ref, b2_ref, o_ref):
    # x_ref : (TB, 1024) f32/bf16  activation tile (read straight from HBM)
    # w1_ref: (1024, 8)  bf16      fc1 weight, pre-transposed + trimmed to the 8 used cols
    # b1_ref: (1, 8)     f32
    # w2_ref: (8, 1)     f32       fc2 weight as a column
    # b2_ref: (1, 1)     f32
    # o_ref : (1, TB)    f32       lane-dense probability row for this tile
    x = x_ref[...].astype(jnp.bfloat16)                     # in-kernel cast (VPU)
    # fc1 on the MXU (bf16 inputs, f32 accumulation), bias + ReLU on the VPU.
    h = jnp.dot(x, w1_ref[...], preferred_element_type=jnp.float32)   # (TB, 8)
    h = jnp.maximum(h + b1_ref[...], 0.0)
    # Relayout so the batch dim is lane-dense; small (TB, 8) transpose on the XLU.
    ht = jnp.transpose(h)                                   # (8, TB)
    # fc2 as an elementwise multiply + 8-sublane reduction (VPU/XLU), not a 2nd MXU op.
    z = jnp.sum(ht * w2_ref[...], axis=0, keepdims=True) + b2_ref[...]   # (1, TB)
    # Numerically stable sigmoid: exp stays in (0, 1], no inf intermediate.
    ez = jnp.exp(-jnp.abs(z))
    o_ref[...] = jnp.where(z >= 0.0, 1.0, ez) / (1.0 + ez)


def classifier2_forward(bert_cls, w1, b1, w2, b2, *, tb=None):
    """bert_cls: (B, 1024) CLS embeddings. Returns (B, 1) f32 probabilities."""
    B = bert_cls.shape[0]
    tb = _choose_tb(B, tb)
    num_tiles = pl.cdiv(B, tb)

    # Only the first 8 fc1 columns feed fc2 -> drop the 24 dead columns up front.
    w1_used = w1[:, :H_FC2_IN].astype(jnp.bfloat16)          # (1024, 8)
    b1_used = b1[:, :H_FC2_IN].astype(jnp.float32)           # (1, 8)
    w2_col = w2.reshape(H_FC2_IN, H_OUT).astype(jnp.float32)  # (8, 1)
    b2_s = b2.reshape(1, 1).astype(jnp.float32)               # (1, 1)

    # VMEM budget: 2 double-buffered x tiles + small operands/outputs + slack.
    x_block_bytes = tb * H_IN * jnp.dtype(bert_cls.dtype).itemsize
    vmem_limit = int(min(48 << 20, 2 * x_block_bytes + (6 << 20)))

    grid_spec = pltpu.PrefetchScalarGridSpec(
        num_scalar_prefetch=0,
        grid=(num_tiles,),
        in_specs=[
            pl.BlockSpec((tb, H_IN), lambda i: (i, 0)),            # x tile
            pl.BlockSpec((H_IN, H_FC2_IN), lambda i: (0, 0)),      # w1 (VMEM-resident)
            pl.BlockSpec((1, H_FC2_IN), lambda i: (0, 0)),         # b1
            pl.BlockSpec((H_FC2_IN, H_OUT), lambda i: (0, 0)),     # w2 column
            pl.BlockSpec((1, 1), lambda i: (0, 0)),                # b2
        ],
        # Lane-dense output: one (1, tb) row per tile; leading dim squeezed in-kernel.
        out_specs=pl.BlockSpec((None, 1, tb), lambda i: (i, 0, 0)),
    )

    out = pl.pallas_call(
        _head_kernel,
        out_shape=jax.ShapeDtypeStruct((num_tiles, 1, tb), jnp.float32),
        grid_spec=grid_spec,
        compiler_params=pltpu.CompilerParams(
            dimension_semantics=("parallel",),   # batch tiles split across TCs on v7x
            vmem_limit_bytes=vmem_limit,
        ),
    )(bert_cls, w1_used, b1_used, w2_col, b2_s)

    # (num_tiles, 1, tb) -> (num_tiles*tb,) -> drop the padded tail -> (B, 1)
    return out.reshape(num_tiles * tb)[:B].reshape(B, H_OUT)


def init_params(key):
    """PyTorch-style Linear inits; weights stored pre-transposed as (in, out)."""
    k1, k2, k3, k4 = jax.random.split(key, 4)
    bnd1 = 1.0 / jnp.sqrt(jnp.float32(H_IN))
    bnd2 = 1.0 / jnp.sqrt(jnp.float32(H_FC2_IN))
    w1 = jax.random.uniform(k1, (H_IN, H_MID), jnp.float32, -bnd1, bnd1)
    b1 = jax.random.uniform(k2, (1, H_MID), jnp.float32, -bnd1, bnd1)
    w2 = jax.random.uniform(k3, (H_FC2_IN, H_OUT), jnp.float32, -bnd2, bnd2)
    b2 = jax.random.uniform(k4, (1, H_OUT), jnp.float32, -bnd2, bnd2)
    return w1, b1, w2, b2


def reference_forward(bert_cls, w1, b1, w2, b2):
    """Pure-JAX reference matching the kernel semantics (bf16 matmul inputs, f32 math)."""
    xb = bert_cls.astype(jnp.bfloat16).astype(jnp.float32)
    w1b = w1[:, :H_FC2_IN].astype(jnp.bfloat16).astype(jnp.float32)
    h = jnp.maximum(xb @ w1b + b1[:, :H_FC2_IN], 0.0)
    z = h @ w2 + b2
    return jax.nn.sigmoid(z)


if __name__ == "__main__":
    key = jax.random.PRNGKey(0)
    k_params, k_x1, k_x2 = jax.random.split(key, 3)
    w1, b1, w2, b2 = init_params(k_params)

    # Small demo batch (single tile).
    B = 8
    bert_cls = jax.random.normal(k_x1, (B, H_IN), jnp.float32)
    out = jax.block_until_ready(classifier2_forward(bert_cls, w1, b1, w2, b2))
    ref = reference_forward(bert_cls, w1, b1, w2, b2)
    assert out.shape == (B, H_OUT)
    assert jnp.allclose(out, ref, atol=2e-3, rtol=2e-3), "mismatch vs JAX reference (B=8)"

    # Larger batch exercising the multi-tile grid + ragged (non-divisible) tail.
    B2 = 1000
    bert_cls2 = jax.random.normal(k_x2, (B2, H_IN), jnp.float32)
    out2 = jax.block_until_ready(classifier2_forward(bert_cls2, w1, b1, w2, b2))
    ref2 = reference_forward(bert_cls2, w1, b1, w2, b2)
    assert out2.shape == (B2, H_OUT)
    assert jnp.allclose(out2, ref2, atol=2e-3, rtol=2e-3), "mismatch vs JAX reference (B=1000)"

    print("KERNEL_OK")
</pallas_src>

<mosaic_0001>
module attributes {stable_mosaic.version = 11 : i64} {
  func.func @_head_kernel(%arg0: i32, %arg1: memref<8x1024xf32, #tpu.memory_space<vmem>>, %arg2: memref<1024x8xbf16, #tpu.memory_space<vmem>>, %arg3: memref<1x8xf32, #tpu.memory_space<vmem>>, %arg4: memref<8x1xf32, #tpu.memory_space<vmem>>, %arg5: memref<1x1xf32, #tpu.memory_space<vmem>>, %arg6: memref<1x1x8xf32, #tpu.memory_space<vmem>>) attributes {dimension_semantics = [#tpu.dimension_semantics<parallel>], iteration_bounds = array<i64: 1>, scalar_prefetch = 0 : i64, scratch_operands = 0 : i64, tpu.core_type = #tpu.core_type<tc>, window_params = [{transform_indices = @transform_0, window_bounds = array<i64: 8, 1024>}, {pipeline_mode = #tpu.pipeline_mode<synchronous>, transform_indices = @transform_1, window_bounds = array<i64: 1024, 8>}, {pipeline_mode = #tpu.pipeline_mode<synchronous>, transform_indices = @transform_2, window_bounds = array<i64: 1, 8>}, {pipeline_mode = #tpu.pipeline_mode<synchronous>, transform_indices = @transform_3, window_bounds = array<i64: 8, 1>}, {pipeline_mode = #tpu.pipeline_mode<synchronous>, transform_indices = @transform_4, window_bounds = array<i64: 1, 1>}, {transform_indices = @transform_5, window_bounds = array<i64: 1, 1, 8>}]} {
    %c0 = arith.constant 0 : index
    %c0_0 = arith.constant 0 : index
    %0 = vector.load %arg1[%c0, %c0_0] : memref<8x1024xf32, #tpu.memory_space<vmem>>, vector<8x1024xf32>
    %1 = arith.truncf %0 : vector<8x1024xf32> to vector<8x1024xbf16>
    %c0_1 = arith.constant 0 : index
    %c0_2 = arith.constant 0 : index
    %2 = vector.load %arg2[%c0_1, %c0_2] : memref<1024x8xbf16, #tpu.memory_space<vmem>>, vector<1024x8xbf16>
    %cst = arith.constant dense<0.000000e+00> : vector<8x8xf32>
    %3 = tpu.matmul %1, %2, %cst {dimension_numbers = #tpu.dot_dimension_numbers<[1], [0], [0], [1], [0, 0, 1, 1], [], []>} : vector<8x1024xbf16>, vector<1024x8xbf16>, vector<8x8xf32> -> vector<8x8xf32>
    %c0_3 = arith.constant 0 : index
    %c0_4 = arith.constant 0 : index
    %4 = vector.load %arg3[%c0_3, %c0_4] : memref<1x8xf32, #tpu.memory_space<vmem>>, vector<1x8xf32>
    %5 = vector.broadcast %4 : vector<1x8xf32> to vector<8x8xf32>
    %6 = arith.addf %3, %5 : vector<8x8xf32>
    %cst_5 = arith.constant 0.000000e+00 : f32
    %7 = vector.broadcast %cst_5 : f32 to vector<8x8xf32>
    %8 = arith.maximumf %6, %7 : vector<8x8xf32>
    %9 = tpu.transpose %8, [1, 0] : vector<8x8xf32> -> vector<8x8xf32>
    %c0_6 = arith.constant 0 : index
    %c0_7 = arith.constant 0 : index
    %10 = vector.load %arg4[%c0_6, %c0_7] : memref<8x1xf32, #tpu.memory_space<vmem>>, vector<8x1xf32>
    %11 = vector.broadcast %10 : vector<8x1xf32> to vector<8x8xf32>
    %12 = arith.mulf %9, %11 : vector<8x8xf32>
    %cst_8 = arith.constant dense<0.000000e+00> : vector<8xf32>
    %13 = vector.multi_reduction <add>, %12, %cst_8 [0] : vector<8x8xf32> to vector<8xf32>
    %14 = vector.shape_cast %13 : vector<8xf32> to vector<1x8xf32>
    %c0_9 = arith.constant 0 : index
    %c0_10 = arith.constant 0 : index
    %15 = vector.load %arg5[%c0_9, %c0_10] : memref<1x1xf32, #tpu.memory_space<vmem>>, vector<1x1xf32>
    %16 = vector.broadcast %15 : vector<1x1xf32> to vector<1x8xf32>
    %17 = arith.addf %14, %16 : vector<1x8xf32>
    %18 = math.absf %17 : vector<1x8xf32>
    %cst_11 = arith.constant 0.000000e+00 : f32
    %19 = vector.broadcast %cst_11 : f32 to vector<1x8xf32>
    %20 = arith.subf %19, %18 : vector<1x8xf32>
    %21 = math.exp %20 : vector<1x8xf32>
    %cst_12 = arith.constant 0.000000e+00 : f32
    %22 = vector.broadcast %cst_12 : f32 to vector<1x8xf32>
    %23 = arith.cmpf oge, %17, %22 : vector<1x8xf32>
    %cst_13 = arith.constant 1.000000e+00 : f32
    %24 = vector.broadcast %cst_13 : f32 to vector<1x8xf32>
    %25 = arith.select %23, %24, %21 : vector<1x8xi1>, vector<1x8xf32>
    %cst_14 = arith.constant 1.000000e+00 : f32
    %26 = vector.broadcast %cst_14 : f32 to vector<1x8xf32>
    %27 = arith.addf %26, %21 : vector<1x8xf32>
    %28 = arith.divf %25, %27 : vector<1x8xf32>
    %c0_15 = arith.constant 0 : index
    %c0_16 = arith.constant 0 : index
    %c0_17 = arith.constant 0 : index
    %29 = vector.load %arg6[%c0_15, %c0_16, %c0_17] : memref<1x1x8xf32, #tpu.memory_space<vmem>>, vector<1x1x8xf32>
    %30 = vector.shape_cast %29 : vector<1x1x8xf32> to vector<1x8xf32>
    %31 = vector.shape_cast %28 : vector<1x8xf32> to vector<1x1x8xf32>
    tpu.vector_store %arg6[%c0_15, %c0_16, %c0_17], %31 {strides = array<i32>} : memref<1x1x8xf32, #tpu.memory_space<vmem>>, vector<1x1x8xf32>,
    return
  }
  func.func @transform_0(%arg0: i32) -> (i32, i32) {
    %c0_i32 = arith.constant 0 : i32
    %c0_i32_0 = arith.constant 0 : i32
    return %arg0, %c0_i32 : i32, i32
  }
  func.func @transform_1(%arg0: i32) -> (i32, i32) {
    %c0_i32 = arith.constant 0 : i32
    %c0_i32_0 = arith.constant 0 : i32
    %c0_i32_1 = arith.constant 0 : i32
    return %c0_i32, %c0_i32_0 : i32, i32
  }
  func.func @transform_2(%arg0: i32) -> (i32, i32) {
    %c0_i32 = arith.constant 0 : i32
    %c0_i32_0 = arith.constant 0 : i32
    %c0_i32_1 = arith.constant 0 : i32
    return %c0_i32, %c0_i32_0 : i32, i32
  }
  func.func @transform_3(%arg0: i32) -> (i32, i32) {
    %c0_i32 = arith.constant 0 : i32
    %c0_i32_0 = arith.constant 0 : i32
    %c0_i32_1 = arith.constant 0 : i32
    return %c0_i32, %c0_i32_0 : i32, i32
  }
  func.func @transform_4(%arg0: i32) -> (i32, i32) {
    %c0_i32 = arith.constant 0 : i32
    %c0_i32_0 = arith.constant 0 : i32
    %c0_i32_1 = arith.constant 0 : i32
    return %c0_i32, %c0_i32_0 : i32, i32
  }
  func.func @transform_5(%arg0: i32) -> (i32, i32, i32) {
    %c0_i32 = arith.constant 0 : i32
    %c0_i32_0 = arith.constant 0 : i32
    %c0_i32_1 = arith.constant 0 : i32
    return %arg0, %c0_i32, %c0_i32_0 : i32, i32, i32
  }
}

</mosaic_0001>

<llo_original>
// kernel: tpu_custom_call.1
$region0: #{tpu_custom_call.1}
  #allocation0 [shape = 'u32[]', space=smem, size = 0x4, offset = 0x4, fixed_abs, tag = 'smem constant byte address 0x4 - core index']
  #allocation1 [shape = 'u32[144,128]{1,0:T(1,128)}', space=vmem, size = 0x12000, scoped, tag = 'internal scratch']
  #allocation2 [shape = 'f32[1,1]{1,0:T(1,128)S(1)}', space=vmem, size = 0x200, scoped, tag = 'scoped memory for tpu_custom_call.1']
  %s0 = inlined_call_operand.vmem [shape: f32[8,1024], index: 0, kind: input, shape index: {}]
  %s1 = inlined_call_operand.vmem [shape: bf16[1024,8], index: 1, kind: input, shape index: {}]
  %s2 = inlined_call_operand.vmem [shape: f32[1,8], index: 2, kind: input, shape index: {}]
  %s3 = inlined_call_operand.vmem [shape: f32[8,1], index: 3, kind: input, shape index: {}]
  %s4 = inlined_call_operand.<no memory space> [shape: f32[1,1], index: 4, kind: input, shape index: {}]
  %s5 = inlined_call_operand.hbm [shape: f32[1,1,8], index: 5, kind: output, shape index: {}]
  %s6 = sld [smem:[#allocation0]]
  $region30: #{tpu_custom_call.1} parent=0
    _
  %s8 = ssub.s32 1, %s6
  %s9 = scalar_select 0, %s8, %s6
  %v10 = vstv %s4
  %11 = vst [vmem:[#allocation2] sm:$0x1] %v10
  $region1: #{tpu_custom_call.1} parent=0
    #allocation3 [shape = 'u8[512]{0}', space=vmem, size = 0x400, scoped, tag = 'output window, operand 0, single buffered']
    #allocation4 [shape = 's32[1]{0}', space=sflag, size = 0x4, scoped, tag = 'scoped memory for tpu_custom_call.1']
    %12 = vsyncpa [#allocation4], 0
    // Predicated region
    $region2: #{tpu_custom_call.1} parent=1 // pred_check
      _
    $region3: #{tpu_custom_call.1} parent=1 // pred_check_branch
      %14 = sbr.rel (0) target = $region5
    $region4: #{tpu_custom_call.1} parent=1 // pred_region
      _
    $region5: #{tpu_custom_call.1} parent=1 // pred_fallthru
      _
    // Predicated region
    $region6: #{tpu_custom_call.1} parent=1 // pred_check
      _
    $region7: #{tpu_custom_call.1} parent=1 // pred_check_branch
      %16 = sbr.rel (0) target = $region9
    $region8: #{tpu_custom_call.1} parent=1 // pred_region
      _
    $region9: #{tpu_custom_call.1} parent=1 // pred_fallthru
      _
    // Predicated region
    $region10: #{tpu_custom_call.1} parent=1 // pred_check
      _
    $region11: #{tpu_custom_call.1} parent=1 // pred_check_branch
      %18 = sbr.rel (0) target = $region13
    $region12: #{tpu_custom_call.1} parent=1 // pred_region
      _
    $region13: #{tpu_custom_call.1} parent=1 // pred_fallthru
      _
    // Predicated region
    $region14: #{tpu_custom_call.1} parent=1 // pred_check
      _
    $region15: #{tpu_custom_call.1} parent=1 // pred_check_branch
      %20 = sbr.rel (0) target = $region17
    $region16: #{tpu_custom_call.1} parent=1 // pred_region
      _
    $region17: #{tpu_custom_call.1} parent=1 // pred_fallthru
      _
    // Predicated region
    $region18: #{tpu_custom_call.1} parent=1 // pred_check
      _
    $region19: #{tpu_custom_call.1} parent=1 // pred_check_branch
      %22 = sbr.rel (0) target = $region21
    $region20: #{tpu_custom_call.1} parent=1 // pred_region
      _
    $region21: #{tpu_custom_call.1} parent=1 // pred_fallthru
      _
    %v24 = vld [vmem:[%s0] sm:$0xff]
    %v25 = vld [vmem:[%s0 + $0x8] sm:$0xff]
    %v26 = vld [vmem:[%s0 + $0x10] sm:$0xff]
    %v27 = vld [vmem:[%s0 + $0x18] sm:$0xff]
    %v28 = vld [vmem:[%s0 + $0x20] sm:$0xff]
    %v29 = vld [vmem:[%s0 + $0x28] sm:$0xff]
    %v30 = vld [vmem:[%s0 + $0x30] sm:$0xff]
    %v31 = vld [vmem:[%s0 + $0x38] sm:$0xff]
    %v32 = vpack.c.bf16 %v24, %v24
    %v33 = vpack.c.bf16 %v25, %v25
    %v34 = vpack.c.bf16 %v26, %v26
    %v35 = vpack.c.bf16 %v27, %v27
    %v36 = vpack.c.bf16 %v28, %v28
    %v37 = vpack.c.bf16 %v29, %v29
    %v38 = vpack.c.bf16 %v30, %v30
    %v39 = vpack.c.bf16 %v31, %v31
    %v40 = vld [vmem:[%s1] sm:$0xf]
    %v41 = vld [vmem:[%s1 + $0x4] sm:$0xf]
    %v42 = vld [vmem:[%s1 + $0x8] sm:$0xf]
    %v43 = vld [vmem:[%s1 + $0xc] sm:$0xf]
    %v44 = vld [vmem:[%s1 + $0x10] sm:$0xf]
    %v45 = vld [vmem:[%s1 + $0x14] sm:$0xf]
    %v46 = vld [vmem:[%s1 + $0x18] sm:$0xf]
    %v47 = vld [vmem:[%s1 + $0x1c] sm:$0xf]
    %v48 = vld [vmem:[%s1 + $0x20] sm:$0xf]
    %v49 = vld [vmem:[%s1 + $0x24] sm:$0xf]
    %v50 = vld [vmem:[%s1 + $0x28] sm:$0xf]
    %v51 = vld [vmem:[%s1 + $0x2c] sm:$0xf]
    %v52 = vld [vmem:[%s1 + $0x30] sm:$0xf]
    %v53 = vld [vmem:[%s1 + $0x34] sm:$0xf]
    %v54 = vld [vmem:[%s1 + $0x38] sm:$0xf]
    %v55 = vld [vmem:[%s1 + $0x3c] sm:$0xf]
    %v56 = vld [vmem:[%s1 + $0x40] sm:$0xf]
    %v57 = vld [vmem:[%s1 + $0x44] sm:$0xf]
    %v58 = vld [vmem:[%s1 + $0x48] sm:$0xf]
    %v59 = vld [vmem:[%s1 + $0x4c] sm:$0xf]
    %v60 = vld [vmem:[%s1 + $0x50] sm:$0xf]
    %v61 = vld [vmem:[%s1 + $0x54] sm:$0xf]
    %v62 = vld [vmem:[%s1 + $0x58] sm:$0xf]
    %v63 = vld [vmem:[%s1 + $0x5c] sm:$0xf]
    %v64 = vld [vmem:[%s1 + $0x60] sm:$0xf]
    %v65 = vld [vmem:[%s1 + $0x64] sm:$0xf]
    %v66 = vld [vmem:[%s1 + $0x68] sm:$0xf]
    %v67 = vld [vmem:[%s1 + $0x6c] sm:$0xf]
    %v68 = vld [vmem:[%s1 + $0x70] sm:$0xf]
    %v69 = vld [vmem:[%s1 + $0x74] sm:$0xf]
    %v70 = vld [vmem:[%s1 + $0x78] sm:$0xf]
    %v71 = vld [vmem:[%s1 + $0x7c] sm:$0xf]
    %v72 = vld [vmem:[%s1 + $0x80] sm:$0xf]
    %v73 = vld [vmem:[%s1 + $0x84] sm:$0xf]
    %v74 = vld [vmem:[%s1 + $0x88] sm:$0xf]
    %v75 = vld [vmem:[%s1 + $0x8c] sm:$0xf]
    %v76 = vld [vmem:[%s1 + $0x90] sm:$0xf]
    %v77 = vld [vmem:[%s1 + $0x94] sm:$0xf]
    %v78 = vld [vmem:[%s1 + $0x98] sm:$0xf]
    %v79 = vld [vmem:[%s1 + $0x9c] sm:$0xf]
    %v80 = vld [vmem:[%s1 + $0xa0] sm:$0xf]
    %v81 = vld [vmem:[%s1 + $0xa4] sm:$0xf]
    %v82 = vld [vmem:[%s1 + $0xa8] sm:$0xf]
    %v83 = vld [vmem:[%s1 + $0xac] sm:$0xf]
    %v84 = vld [vmem:[%s1 + $0xb0] sm:$0xf]
    %v85 = vld [vmem:[%s1 + $0xb4] sm:$0xf]
    %v86 = vld [vmem:[%s1 + $0xb8] sm:$0xf]
    %v87 = vld [vmem:[%s1 + $0xbc] sm:$0xf]
    %v88 = vld [vmem:[%s1 + $0xc0] sm:$0xf]
    %v89 = vld [vmem:[%s1 + $0xc4] sm:$0xf]
    %v90 = vld [vmem:[%s1 + $0xc8] sm:$0xf]
    %v91 = vld [vmem:[%s1 + $0xcc] sm:$0xf]
    %v92 = vld [vmem:[%s1 + $0xd0] sm:$0xf]
    %v93 = vld [vmem:[%s1 + $0xd4] sm:$0xf]
    %v94 = vld [vmem:[%s1 + $0xd8] sm:$0xf]
    %v95 = vld [vmem:[%s1 + $0xdc] sm:$0xf]
    %v96 = vld [vmem:[%s1 + $0xe0] sm:$0xf]
    %v97 = vld [vmem:[%s1 + $0xe4] sm:$0xf]
    %v98 = vld [vmem:[%s1 + $0xe8] sm:$0xf]
    %v99 = vld [vmem:[%s1 + $0xec] sm:$0xf]
    %v100 = vld [vmem:[%s1 + $0xf0] sm:$0xf]
    %v101 = vld [vmem:[%s1 + $0xf4] sm:$0xf]
    %v102 = vld [vmem:[%s1 + $0xf8] sm:$0xf]
    %v103 = vld [vmem:[%s1 + $0xfc] sm:$0xf]
    %v104 = vld [vmem:[%s1 + $0x100] sm:$0xf]
    %v105 = vld [vmem:[%s1 + $0x104] sm:$0xf]
    %v106 = vld [vmem:[%s1 + $0x108] sm:$0xf]
    %v107 = vld [vmem:[%s1 + $0x10c] sm:$0xf]
    %v108 = vld [vmem:[%s1 + $0x110] sm:$0xf]
    %v109 = vld [vmem:[%s1 + $0x114] sm:$0xf]
    %v110 = vld [vmem:[%s1 + $0x118] sm:$0xf]
    %v111 = vld [vmem:[%s1 + $0x11c] sm:$0xf]
    %v112 = vld [vmem:[%s1 + $0x120] sm:$0xf]
    %v113 = vld [vmem:[%s1 + $0x124] sm:$0xf]
    %v114 = vld [vmem:[%s1 + $0x128] sm:$0xf]
    %v115 = vld [vmem:[%s1 + $0x12c] sm:$0xf]
    %v116 = vld [vmem:[%s1 + $0x130] sm:$0xf]
    %v117 = vld [vmem:[%s1 + $0x134] sm:$0xf]
    %v118 = vld [vmem:[%s1 + $0x138] sm:$0xf]
    %v119 = vld [vmem:[%s1 + $0x13c] sm:$0xf]
    %v120 = vld [vmem:[%s1 + $0x140] sm:$0xf]
    %v121 = vld [vmem:[%s1 + $0x144] sm:$0xf]
    %v122 = vld [vmem:[%s1 + $0x148] sm:$0xf]
    %v123 = vld [vmem:[%s1 + $0x14c] sm:$0xf]
    %v124 = vld [vmem:[%s1 + $0x150] sm:$0xf]
    %v125 = vld [vmem:[%s1 + $0x154] sm:$0xf]
    %v126 = vld [vmem:[%s1 + $0x158] sm:$0xf]
    %v127 = vld [vmem:[%s1 + $0x15c] sm:$0xf]
    %v128 = vld [vmem:[%s1 + $0x160] sm:$0xf]
    %v129 = vld [vmem:[%s1 + $0x164] sm:$0xf]
    %v130 = vld [vmem:[%s1 + $0x168] sm:$0xf]
    %v131 = vld [vmem:[%s1 + $0x16c] sm:$0xf]
    %v132 = vld [vmem:[%s1 + $0x170] sm:$0xf]
    %v133 = vld [vmem:[%s1 + $0x174] sm:$0xf]
    %v134 = vld [vmem:[%s1 + $0x178] sm:$0xf]
    %v135 = vld [vmem:[%s1 + $0x17c] sm:$0xf]
    %v136 = vld [vmem:[%s1 + $0x180] sm:$0xf]
    %v137 = vld [vmem:[%s1 + $0x184] sm:$0xf]
    %v138 = vld [vmem:[%s1 + $0x188] sm:$0xf]
    %v139 = vld [vmem:[%s1 + $0x18c] sm:$0xf]
    %v140 = vld [vmem:[%s1 + $0x190] sm:$0xf]
    %v141 = vld [vmem:[%s1 + $0x194] sm:$0xf]
    %v142 = vld [vmem:[%s1 + $0x198] sm:$0xf]
    %v143 = vld [vmem:[%s1 + $0x19c] sm:$0xf]
    %v144 = vld [vmem:[%s1 + $0x1a0] sm:$0xf]
    %v145 = vld [vmem:[%s1 + $0x1a4] sm:$0xf]
    %v146 = vld [vmem:[%s1 + $0x1a8] sm:$0xf]
    %v147 = vld [vmem:[%s1 + $0x1ac] sm:$0xf]
    %v148 = vld [vmem:[%s1 + $0x1b0] sm:$0xf]
    %v149 = vld [vmem:[%s1 + $0x1b4] sm:$0xf]
    %v150 = vld [vmem:[%s1 + $0x1b8] sm:$0xf]
    %v151 = vld [vmem:[%s1 + $0x1bc] sm:$0xf]
    %v152 = vld [vmem:[%s1 + $0x1c0] sm:$0xf]
    %v153 = vld [vmem:[%s1 + $0x1c4] sm:$0xf]
    %v154 = vld [vmem:[%s1 + $0x1c8] sm:$0xf]
    %v155 = vld [vmem:[%s1 + $0x1cc] sm:$0xf]
    %v156 = vld [vmem:[%s1 + $0x1d0] sm:$0xf]
    %v157 = vld [vmem:[%s1 + $0x1d4] sm:$0xf]
    %v158 = vld [vmem:[%s1 + $0x1d8] sm:$0xf]
    %v159 = vld [vmem:[%s1 + $0x1dc] sm:$0xf]
    %v160 = vld [vmem:[%s1 + $0x1e0] sm:$0xf]
    %v161 = vld [vmem:[%s1 + $0x1e4] sm:$0xf]
    %v162 = vld [vmem:[%s1 + $0x1e8] sm:$0xf]
    %v163 = vld [vmem:[%s1 + $0x1ec] sm:$0xf]
    %v164 = vld [vmem:[%s1 + $0x1f0] sm:$0xf]
    %v165 = vld [vmem:[%s1 + $0x1f4] sm:$0xf]
    %v166 = vld [vmem:[%s1 + $0x1f8] sm:$0xf]
    %v167 = vld [vmem:[%s1 + $0x1fc] sm:$0xf]
    %v168 = vld [vmem:[%s2] sm:$0x1]
    %v170 = vlaneseq
    %v171 = vshrl.u32 %v170, 7
    %v172 = vsub.s32 0, %v171
    %v173 = vrot.slane %v168, %v172
    %v303 = vunpack.c.l.b16 %v40
    %v304 = vunpack.c.l.b16 %v41
    %v305 = vunpack.c.l.b16 %v42
    %v306 = vunpack.c.l.b16 %v43
    %v307 = vunpack.c.l.b16 %v44
    %v308 = vunpack.c.l.b16 %v45
    %v309 = vunpack.c.l.b16 %v46
    %v310 = vunpack.c.l.b16 %v47
    %v311 = vunpack.c.l.b16 %v48
    %v312 = vunpack.c.l.b16 %v49
    %v313 = vunpack.c.l.b16 %v50
    %v314 = vunpack.c.l.b16 %v51
    %v315 = vunpack.c.l.b16 %v52
    %v316 = vunpack.c.l.b16 %v53
    %v317 = vunpack.c.l.b16 %v54
    %v318 = vunpack.c.l.b16 %v55
    %v319 = vunpack.c.l.b16 %v56
    %v320 = vunpack.c.l.b16 %v57
    %v321 = vunpack.c.l.b16 %v58
    %v322 = vunpack.c.l.b16 %v59
    %v323 = vunpack.c.l.b16 %v60
    %v324 = vunpack.c.l.b16 %v61
    %v325 = vunpack.c.l.b16 %v62
    %v326 = vunpack.c.l.b16 %v63
    %v327 = vunpack.c.l.b16 %v64
    %v328 = vunpack.c.l.b16 %v65
    %v329 = vunpack.c.l.b16 %v66
    %v330 = vunpack.c.l.b16 %v67
    %v331 = vunpack.c.l.b16 %v68
    %v332 = vunpack.c.l.b16 %v69
    %v333 = vunpack.c.l.b16 %v70
    %v334 = vunpack.c.l.b16 %v71
    %v335 = vunpack.c.l.b16 %v72
    %v336 = vunpack.c.l.b16 %v73
    %v337 = vunpack.c.l.b16 %v74
    %v338 = vunpack.c.l.b16 %v75
    %v339 = vunpack.c.l.b16 %v76
    %v340 = vunpack.c.l.b16 %v77
    %v341 = vunpack.c.l.b16 %v78
    %v342 = vunpack.c.l.b16 %v79
    %v343 = vunpack.c.l.b16 %v80
    %v344 = vunpack.c.l.b16 %v81
    %v345 = vunpack.c.l.b16 %v82
    %v346 = vunpack.c.l.b16 %v83
    %v347 = vunpack.c.l.b16 %v84
    %v348 = vunpack.c.l.b16 %v85
    %v349 = vunpack.c.l.b16 %v86
    %v350 = vunpack.c.l.b16 %v87
    %v351 = vunpack.c.l.b16 %v88
    %v352 = vunpack.c.l.b16 %v89
    %v353 = vunpack.c.l.b16 %v90
    %v354 = vunpack.c.l.b16 %v91
    %v355 = vunpack.c.l.b16 %v92
    %v356 = vunpack.c.l.b16 %v93
    %v357 = vunpack.c.l.b16 %v94
    %v358 = vunpack.c.l.b16 %v95
    %v359 = vunpack.c.l.b16 %v96
    %v360 = vunpack.c.l.b16 %v97
    %v361 = vunpack.c.l.b16 %v98
    %v362 = vunpack.c.l.b16 %v99
    %v363 = vunpack.c.l.b16 %v100
    %v364 = vunpack.c.l.b16 %v101
    %v365 = vunpack.c.l.b16 %v102
    %v366 = vunpack.c.l.b16 %v103
    %v367 = vunpack.c.l.b16 %v104
    %v368 = vunpack.c.l.b16 %v105
    %v369 = vunpack.c.l.b16 %v106
    %v370 = vunpack.c.l.b16 %v107
    %v371 = vunpack.c.l.b16 %v108
    %v372 = vunpack.c.l.b16 %v109
    %v373 = vunpack.c.l.b16 %v110
    %v374 = vunpack.c.l.b16 %v111
    %v375 = vunpack.c.l.b16 %v112
    %v376 = vunpack.c.l.b16 %v113
    %v377 = vunpack.c.l.b16 %v114
    %v378 = vunpack.c.l.b16 %v115
    %v379 = vunpack.c.l.b16 %v116
    %v380 = vunpack.c.l.b16 %v117
    %v381 = vunpack.c.l.b16 %v118
    %v382 = vunpack.c.l.b16 %v119
    %v383 = vunpack.c.l.b16 %v120
    %v384 = vunpack.c.l.b16 %v121
    %v385 = vunpack.c.l.b16 %v122
    %v386 = vunpack.c.l.b16 %v123
    %v387 = vunpack.c.l.b16 %v124
    %v388 = vunpack.c.l.b16 %v125
    %v389 = vunpack.c.l.b16 %v126
    %v390 = vunpack.c.l.b16 %v127
    %v391 = vunpack.c.l.b16 %v128
    %v392 = vunpack.c.l.b16 %v129
    %v393 = vunpack.c.l.b16 %v130
    %v394 = vunpack.c.l.b16 %v131
    %v395 = vunpack.c.l.b16 %v132
    %v396 = vunpack.c.l.b16 %v133
    %v397 = vunpack.c.l.b16 %v134
    %v398 = vunpack.c.l.b16 %v135
    %v399 = vunpack.c.l.b16 %v136
    %v400 = vunpack.c.l.b16 %v137
    %v401 = vunpack.c.l.b16 %v138
    %v402 = vunpack.c.l.b16 %v139
    %v403 = vunpack.c.l.b16 %v140
    %v404 = vunpack.c.l.b16 %v141
    %v405 = vunpack.c.l.b16 %v142
    %v406 = vunpack.c.l.b16 %v143
    %v407 = vunpack.c.l.b16 %v144
    %v408 = vunpack.c.l.b16 %v145
    %v409 = vunpack.c.l.b16 %v146
    %v410 = vunpack.c.l.b16 %v147
    %v411 = vunpack.c.l.b16 %v148
    %v412 = vunpack.c.l.b16 %v149
    %v413 = vunpack.c.l.b16 %v150
    %v414 = vunpack.c.l.b16 %v151
    %v415 = vunpack.c.l.b16 %v152
    %v416 = vunpack.c.l.b16 %v153
    %v417 = vunpack.c.l.b16 %v154
    %v418 = vunpack.c.l.b16 %v155
    %v419 = vunpack.c.l.b16 %v156
    %v420 = vunpack.c.l.b16 %v157
    %v421 = vunpack.c.l.b16 %v158
    %v422 = vunpack.c.l.b16 %v159
    %v423 = vunpack.c.l.b16 %v160
    %v424 = vunpack.c.l.b16 %v161
    %v425 = vunpack.c.l.b16 %v162
    %v426 = vunpack.c.l.b16 %v163
    %v427 = vunpack.c.l.b16 %v164
    %v428 = vunpack.c.l.b16 %v165
    %v429 = vunpack.c.l.b16 %v166
    %v430 = vunpack.c.l.b16 %v167
    %v431 = vpack.c.b16 %v304, %v303
    %v432 = vpack.c.b16 %v306, %v305
    %v433 = vpack.c.b16 %v308, %v307
    %v434 = vpack.c.b16 %v310, %v309
    %v435 = vpack.c.b16 %v312, %v311
    %v436 = vpack.c.b16 %v314, %v313
    %v437 = vpack.c.b16 %v316, %v315
    %v438 = vpack.c.b16 %v318, %v317
    %v439 = vpack.c.b16 %v320, %v319
    %v440 = vpack.c.b16 %v322, %v321
    %v441 = vpack.c.b16 %v324, %v323
    %v442 = vpack.c.b16 %v326, %v325
    %v443 = vpack.c.b16 %v328, %v327
    %v444 = vpack.c.b16 %v330, %v329
    %v445 = vpack.c.b16 %v332, %v331
    %v446 = vpack.c.b16 %v334, %v333
    %v447 = vpack.c.b16 %v336, %v335
    %v448 = vpack.c.b16 %v338, %v337
    %v449 = vpack.c.b16 %v340, %v339
    %v450 = vpack.c.b16 %v342, %v341
    %v451 = vpack.c.b16 %v344, %v343
    %v452 = vpack.c.b16 %v346, %v345
    %v453 = vpack.c.b16 %v348, %v347
    %v454 = vpack.c.b16 %v350, %v349
    %v455 = vpack.c.b16 %v352, %v351
    %v456 = vpack.c.b16 %v354, %v353
    %v457 = vpack.c.b16 %v356, %v355
    %v458 = vpack.c.b16 %v358, %v357
    %v459 = vpack.c.b16 %v360, %v359
    %v460 = vpack.c.b16 %v362, %v361
    %v461 = vpack.c.b16 %v364, %v363
    %v462 = vpack.c.b16 %v366, %v365
    %v463 = vpack.c.b16 %v368, %v367
    %v464 = vpack.c.b16 %v370, %v369
    %v465 = vpack.c.b16 %v372, %v371
    %v466 = vpack.c.b16 %v374, %v373
    %v467 = vpack.c.b16 %v376, %v375
    %v468 = vpack.c.b16 %v378, %v377
    %v469 = vpack.c.b16 %v380, %v379
    %v470 = vpack.c.b16 %v382, %v381
    %v471 = vpack.c.b16 %v384, %v383
    %v472 = vpack.c.b16 %v386, %v385
    %v473 = vpack.c.b16 %v388, %v387
    %v474 = vpack.c.b16 %v390, %v389
    %v475 = vpack.c.b16 %v392, %v391
    %v476 = vpack.c.b16 %v394, %v393
    %v477 = vpack.c.b16 %v396, %v395
    %v478 = vpack.c.b16 %v398, %v397
    %v479 = vpack.c.b16 %v400, %v399
    %v480 = vpack.c.b16 %v402, %v401
    %v481 = vpack.c.b16 %v404, %v403
    %v482 = vpack.c.b16 %v406, %v405
    %v483 = vpack.c.b16 %v408, %v407
    %v484 = vpack.c.b16 %v410, %v409
    %v485 = vpack.c.b16 %v412, %v411
    %v486 = vpack.c.b16 %v414, %v413
    %v487 = vpack.c.b16 %v416, %v415
    %v488 = vpack.c.b16 %v418, %v417
    %v489 = vpack.c.b16 %v420, %v419
    %v490 = vpack.c.b16 %v422, %v421
    %v491 = vpack.c.b16 %v424, %v423
    %v492 = vpack.c.b16 %v426, %v425
    %v493 = vpack.c.b16 %v428, %v427
    %v494 = vpack.c.b16 %v430, %v429
    %559 = vmatprep.subr.bf16.mxu0 0
    %560 = vmatpush1.bf16.msra.mxu0 %v431
    %561 = vmatprep.subr.bf16.mxu0 0
    %562 = vmatpush1.bf16.msra.mxu0 %v432
    %563 = vmatprep.subr.bf16.mxu0 0
    %564 = vmatpush1.bf16.msra.mxu0 %v433
    %565 = vmatprep.subr.bf16.mxu0 0
    %566 = vmatpush1.bf16.msra.mxu0 %v434
    %567 = vmatprep.subr.bf16.mxu0 0
    %568 = vmatpush1.bf16.msra.mxu0 %v435
    %569 = vmatprep.subr.bf16.mxu0 0
    %570 = vmatpush1.bf16.msra.mxu0 %v436
    %571 = vmatprep.subr.bf16.mxu0 0
    %572 = vmatpush1.bf16.msra.mxu0 %v437
    %573 = vmatprep.subr.bf16.mxu0 0
    %574 = vmatpush1.bf16.msra.mxu0 %v438
    %575 = vmatprep.subr.bf16.mxu0 0
    %576 = vmatpush1.bf16.msra.mxu0 %v439
    %577 = vmatprep.subr.bf16.mxu0 0
    %578 = vmatpush1.bf16.msra.mxu0 %v440
    %579 = vmatprep.subr.bf16.mxu0 0
    %580 = vmatpush1.bf16.msra.mxu0 %v441
    %581 = vmatprep.subr.bf16.mxu0 0
    %582 = vmatpush1.bf16.msra.mxu0 %v442
    %583 = vmatprep.subr.bf16.mxu0 0
    %584 = vmatpush1.bf16.msra.mxu0 %v443
    %585 = vmatprep.subr.bf16.mxu0 0
    %586 = vmatpush1.bf16.msra.mxu0 %v444
    %587 = vmatprep.subr.bf16.mxu0 0
    %588 = vmatpush1.bf16.msra.mxu0 %v445
    %589 = vmatprep.subr.bf16.mxu0 0
    %590 = vmatpush1.bf16.msra.mxu0 %v446
    %591 = vmatprep.mubr.bf16.mxu0 %v33
    %592 = vmatmul.mubr.bf16.gmra.mrb[0].mxu0 %v32
    %v593 = vpop.f32.mrb[0].mxu0
    %v594 = vadd.f32 %v173, %v593
    %v595 = vpop.f32.mrb[0].mxu0
    %v596 = vpop.f32.mrb[0].mxu0
    %v597 = vpop.f32.mrb[0].mxu0
    %598 = vdwg.mxu0
    %599 = vmatprep.subr.bf16.mxu0 0
    %600 = vmatpush1.bf16.msra.mxu0 %v447
    %601 = vmatprep.subr.bf16.mxu0 0
    %602 = vmatpush1.bf16.msra.mxu0 %v448
    %603 = vmatprep.subr.bf16.mxu0 0
    %604 = vmatpush1.bf16.msra.mxu0 %v449
    %605 = vmatprep.subr.bf16.mxu0 0
    %606 = vmatpush1.bf16.msra.mxu0 %v450
    %607 = vmatprep.subr.bf16.mxu0 0
    %608 = vmatpush1.bf16.msra.mxu0 %v451
    %609 = vmatprep.subr.bf16.mxu0 0
    %610 = vmatpush1.bf16.msra.mxu0 %v452
    %611 = vmatprep.subr.bf16.mxu0 0
    %612 = vmatpush1.bf16.msra.mxu0 %v453
    %613 = vmatprep.subr.bf16.mxu0 0
    %614 = vmatpush1.bf16.msra.mxu0 %v454
    %615 = vmatprep.subr.bf16.mxu0 0
    %616 = vmatpush1.bf16.msra.mxu0 %v455
    %617 = vmatprep.subr.bf16.mxu0 0
    %618 = vmatpush1.bf16.msra.mxu0 %v456
    %619 = vmatprep.subr.bf16.mxu0 0
    %620 = vmatpush1.bf16.msra.mxu0 %v457
    %621 = vmatprep.subr.bf16.mxu0 0
    %622 = vmatpush1.bf16.msra.mxu0 %v458
    %623 = vmatprep.subr.bf16.mxu0 0
    %624 = vmatpush1.bf16.msra.mxu0 %v459
    %625 = vmatprep.subr.bf16.mxu0 0
    %626 = vmatpush1.bf16.msra.mxu0 %v460
    %627 = vmatprep.subr.bf16.mxu0 0
    %628 = vmatpush1.bf16.msra.mxu0 %v461
    %629 = vmatprep.subr.bf16.mxu0 0
    %630 = vmatpush1.bf16.msra.mxu0 %v462
    %631 = vmatprep.mubr.bf16.mxu0 %v35
    %632 = vmatmul.mubr.bf16.gmra.mrb[0].mxu0 %v34
    %v633 = vpop.f32.mrb[0].mxu0
    %v634 = vadd.f32 %v594, %v633
    %v635 = vpop.f32.mrb[0].mxu0
    %v636 = vpop.f32.mrb[0].mxu0
    %v637 = vpop.f32.mrb[0].mxu0
    %638 = vdwg.mxu0
    %639 = vmatprep.subr.bf16.mxu0 0
    %640 = vmatpush1.bf16.msra.mxu0 %v463
    %641 = vmatprep.subr.bf16.mxu0 0
    %642 = vmatpush1.bf16.msra.mxu0 %v464
    %643 = vmatprep.subr.bf16.mxu0 0
    %644 = vmatpush1.bf16.msra.mxu0 %v465
    %645 = vmatprep.subr.bf16.mxu0 0
    %646 = vmatpush1.bf16.msra.mxu0 %v466
    %647 = vmatprep.subr.bf16.mxu0 0
    %648 = vmatpush1.bf16.msra.mxu0 %v467
    %649 = vmatprep.subr.bf16.mxu0 0
    %650 = vmatpush1.bf16.msra.mxu0 %v468
    %651 = vmatprep.subr.bf16.mxu0 0
    %652 = vmatpush1.bf16.msra.mxu0 %v469
    %653 = vmatprep.subr.bf16.mxu0 0
    %654 = vmatpush1.bf16.msra.mxu0 %v470
    %655 = vmatprep.subr.bf16.mxu0 0
    %656 = vmatpush1.bf16.msra.mxu0 %v471
    %657 = vmatprep.subr.bf16.mxu0 0
    %658 = vmatpush1.bf16.msra.mxu0 %v472
    %659 = vmatprep.subr.bf16.mxu0 0
    %660 = vmatpush1.bf16.msra.mxu0 %v473
    %661 = vmatprep.subr.bf16.mxu0 0
    %662 = vmatpush1.bf16.msra.mxu0 %v474
    %663 = vmatprep.subr.bf16.mxu0 0
    %664 = vmatpush1.bf16.msra.mxu0 %v475
    %665 = vmatprep.subr.bf16.mxu0 0
    %666 = vmatpush1.bf16.msra.mxu0 %v476
    %667 = vmatprep.subr.bf16.mxu0 0
    %668 = vmatpush1.bf16.msra.mxu0 %v477
    %669 = vmatprep.subr.bf16.mxu0 0
    %670 = vmatpush1.bf16.msra.mxu0 %v478
    %671 = vmatprep.mubr.bf16.mxu0 %v37
    %672 = vmatmul.mubr.bf16.gmra.mrb[0].mxu0 %v36
    %v673 = vpop.f32.mrb[0].mxu0
    %v674 = vadd.f32 %v634, %v673
    %v675 = vpop.f32.mrb[0].mxu0
    %v676 = vpop.f32.mrb[0].mxu0
    %v677 = vpop.f32.mrb[0].mxu0
    %678 = vdwg.mxu0
    %679 = vmatprep.subr.bf16.mxu0 0
    %680 = vmatpush1.bf16.msra.mxu0 %v479
    %681 = vmatprep.subr.bf16.mxu0 0
    %682 = vmatpush1.bf16.msra.mxu0 %v480
    %683 = vmatprep.subr.bf16.mxu0 0
    %684 = vmatpush1.bf16.msra.mxu0 %v481
    %685 = vmatprep.subr.bf16.mxu0 0
    %686 = vmatpush1.bf16.msra.mxu0 %v482
    %687 = vmatprep.subr.bf16.mxu0 0
    %688 = vmatpush1.bf16.msra.mxu0 %v483
    %689 = vmatprep.subr.bf16.mxu0 0
    %690 = vmatpush1.bf16.msra.mxu0 %v484
    %691 = vmatprep.subr.bf16.mxu0 0
    %692 = vmatpush1.bf16.msra.mxu0 %v485
    %693 = vmatprep.subr.bf16.mxu0 0
    %694 = vmatpush1.bf16.msra.mxu0 %v486
    %695 = vmatprep.subr.bf16.mxu0 0
    %696 = vmatpush1.bf16.msra.mxu0 %v487
    %697 = vmatprep.subr.bf16.mxu0 0
    %698 = vmatpush1.bf16.msra.mxu0 %v488
    %699 = vmatprep.subr.bf16.mxu0 0
    %700 = vmatpush1.bf16.msra.mxu0 %v489
    %701 = vmatprep.subr.bf16.mxu0 0
    %702 = vmatpush1.bf16.msra.mxu0 %v490
    %703 = vmatprep.subr.bf16.mxu0 0
    %704 = vmatpush1.bf16.msra.mxu0 %v491
    %705 = vmatprep.subr.bf16.mxu0 0
    %706 = vmatpush1.bf16.msra.mxu0 %v492
    %707 = vmatprep.subr.bf16.mxu0 0
    %708 = vmatpush1.bf16.msra.mxu0 %v493
    %709 = vmatprep.subr.bf16.mxu0 0
    %710 = vmatpush1.bf16.msra.mxu0 %v494
    %711 = vmatprep.mubr.bf16.mxu0 %v39
    %712 = vmatmul.mubr.bf16.gmra.mrb[0].mxu0 %v38
    %v713 = vpop.f32.mrb[0].mxu0
    %v714 = vadd.f32 %v674, %v713
    %v715 = vpop.f32.mrb[0].mxu0
    %v716 = vpop.f32.mrb[0].mxu0
    %v717 = vpop.f32.mrb[0].mxu0
    %718 = vdwg.mxu0
    %v719 = vmax.f32 %v714, 0.0
    %720 = vxpose.xlu0.b32.start [1/16] %v719, 128
    %721 = vxpose.xlu0.b32.cont [2/16] 0.0, 128
    %722 = vxpose.xlu0.b32.cont [3/16] 0.0, 128
    %723 = vxpose.xlu0.b32.cont [4/16] 0.0, 128
    %724 = vxpose.xlu0.b32.cont [5/16] 0.0, 128
    %725 = vxpose.xlu0.b32.cont [6/16] 0.0, 128
    %726 = vxpose.xlu0.b32.cont [7/16] 0.0, 128
    %727 = vxpose.xlu0.b32.cont [8/16] 0.0, 128
    %728 = vxpose.xlu0.b32.cont [9/16] 0.0, 128
    %729 = vxpose.xlu0.b32.cont [10/16] 0.0, 128
    %730 = vxpose.xlu0.b32.cont [11/16] 0.0, 128
    %731 = vxpose.xlu0.b32.cont [12/16] 0.0, 128
    %732 = vxpose.xlu0.b32.cont [13/16] 0.0, 128
    %733 = vxpose.xlu0.b32.cont [14/16] 0.0, 128
    %734 = vxpose.xlu0.b32.cont [15/16] 0.0, 128
    %735 = vxpose.xlu0.b32.end [16/16] 0.0, 128
    %v736 = vpop.trf.xlu0
    %v737 = vpop.trf.xlu0
    %v738 = vpop.trf.xlu0
    %v739 = vpop.trf.xlu0
    %v740 = vpop.trf.xlu0
    %v741 = vpop.trf.xlu0
    %v742 = vpop.trf.xlu0
    %v743 = vpop.trf.xlu0
    %v744 = vpop.trf.xlu0
    %v745 = vpop.trf.xlu0
    %v746 = vpop.trf.xlu0
    %v747 = vpop.trf.xlu0
    %v748 = vpop.trf.xlu0
    %v749 = vpop.trf.xlu0
    %v750 = vpop.trf.xlu0
    %v751 = vpop.trf.xlu0
    %v752 = vld [vmem:[%s3] sm:$0xff]
    %754 = vset.pattern.permute.xlu0 0
    %755 = vperm.xlu0 %754, %v752
    %v756 = vpop.permute.xlu0 %755
    %v758 = vmul.f32 %v736, %v756
    %vm759 = vcmask 64512
    %v760 = vsel %vm759, %v758, 0.0
    %v761 = vrot.slane %v760, 4
    %v762 = vadd.f32 %v760, %v761
    %v763 = vrot.slane %v762, 2
    %v764 = vadd.f32 %v762, %v763
    %v765 = vrot.slane %v764, 1
    %v766 = vadd.f32 %v764, %v765
    %v767 = vld [vmem:[#allocation2] sm:$0x1]
    %769 = vset.pattern.permute.xlu0 0
    %770 = vperm.xlu0 %769, %v767
    %v771 = vpop.permute.xlu0 %770
    %v773 = vlaneseq
    %v774 = vshrl.u32 %v773, 7
    %v775 = vsub.s32 0, %v774
    %v776 = vrot.slane %v771, %v775
    %v777 = vadd.f32 %v766, %v776
    %v778 = vand.u32 2147483647, %v777
    %v779 = vsub.f32 0.0, %v778
    %v780 = vmul.f32 %v779, 1.442695
    %v781 = vpow.pop %v780
    %vm782 = vcmp.ge.f32.partialorder %v777, 0.0
    %v783 = vsel %vm782, 1.0, %v781
    %v784 = vadd.f32 %v781, 1.0
    %v785 = vrcp.pop %v784
    %v786 = vmul.f32 %v783, %v785
    %vm787 = vcmask 57344
    %788 = vst.msk [vmem:[#allocation3] sm:$0x1] %vm787, %v786
    // Predicated region
    $region22: #{tpu_custom_call.1} parent=1 // pred_check
      _
    $region23: #{tpu_custom_call.1} parent=1 // pred_check_branch
      %790 = sbr.rel (0) target = $region25
    $region24: #{tpu_custom_call.1} parent=1 // pred_region
      %s792 = ssub.s32 16, 16
      %793 = vsyncadd [#allocation4], %s792
      %s795 = sshll.u32 [#allocation3], 4
      %s796 = int_to_ptr.vmem [resolvable:$true] %s795
      %798 = dma.vmem_to_hbm [thread:$0]  %s796, 16, %s5, [#allocation4]
    $region25: #{tpu_custom_call.1} parent=1 // pred_fallthru
      _
    // Predicated region
    $region26: #{tpu_custom_call.1} parent=1 // pred_check
      _
    $region27: #{tpu_custom_call.1} parent=1 // pred_check_branch
      %800 = sbr.rel (0) target = $region29
    $region28: #{tpu_custom_call.1} parent=1 // pred_region
      %801 = dma.done [#allocation4], 16
    $region29: #{tpu_custom_call.1} parent=1 // pred_fallthru
      _
    %802 = vsyncpa [#allocation4], 1

</llo_original>
